<compile_context>
chip_gen: v7x
topology: tpu7x:2x2x1
jax: 0.10.0
libtpu: 0.0.40
codegen_flags: <defaults>
</compile_context>

<pallas_src>
import jax
import jax.numpy as jnp
from jax.experimental import pallas as pl
from jax.experimental.pallas import tpu as pltpu

VOCAB_SIZE = 100
EMBED_DIM = 16
LANE = 128


def _toy_lm_kernel(ids_ref, emb_ref, w_ref, b_ref, out_ref):
    # ids_ref: SMEM [N] int32   (scalar-prefetched, pre-clamped token ids)
    # emb_ref: VMEM [V, D] f32  (embedding table)
    # w_ref:   VMEM [D, Vp]     (fc weight, pre-transposed + vocab-padded)
    # b_ref:   VMEM [1, Vp] f32 (fc bias, vocab-padded; pad cols may be -1e30)
    # out_ref: VMEM [N, Vp] f32 (logits, lane-dense)
    n = out_ref.shape[0]

    # Embedding lookup = direct row gather into vregs (statically unrolled,
    # no VMEM scratch, no masked stores). Ids were clamped in the wrapper.
    rows = [emb_ref[pl.ds(ids_ref[i], 1), :] for i in range(n)]
    x = jnp.concatenate(rows, axis=0).astype(w_ref.dtype)  # (N, D)

    # Projection: single (N, D) @ (D, Vp) MXU pass, f32 accumulation.
    logits = jnp.dot(x, w_ref[...], preferred_element_type=jnp.float32)
    out_ref[...] = logits + b_ref[...]


def prepare_params(emb_table, fc_weight, fc_bias, *,
                   param_dtype=jnp.bfloat16, mask_pad=False):
    """One-time parameter prep (pad vocab to a lane multiple, transpose, cast).

    emb_table: [V, D], fc_weight: [V, D] (torch nn.Linear layout), fc_bias: [V].
    If mask_pad=True, the pad logit columns get bias -1e30 so a padded output
    can be fed straight into softmax/argmax.
    """
    V, D = emb_table.shape
    Vp = ((V + LANE - 1) // LANE) * LANE  # 100 -> 128 (lane-dense output tile)

    emb = emb_table.astype(jnp.float32)   # f32 rows: robust dynamic-row gather
    w = jnp.zeros((D, Vp), param_dtype).at[:, :V].set(
        fc_weight.T.astype(param_dtype))
    pad_bias = jnp.float32(-1e30) if mask_pad else jnp.float32(0.0)
    b = jnp.full((1, Vp), pad_bias, jnp.float32).at[:, :V].set(
        fc_bias.astype(jnp.float32))
    return emb, w, b


def toy_language_model(x, params, *, return_padded=False):
    """x: [B, S] int token ids. params: output of prepare_params().

    Returns logits [B, S, V] f32 (or the lane-dense [B, S, Vp] padded logits if
    return_padded=True, which skips the post-kernel un-pad slice).
    """
    emb, w, b = params
    B, S = x.shape
    N = B * S
    V, D = emb.shape
    Vp = w.shape[1]

    # Vectorized clamp once (jnp.take semantics for out-of-range ids).
    ids = jnp.clip(x.reshape(N), 0, V - 1).astype(jnp.int32)

    cost = pl.CostEstimate(
        flops=2 * N * D * Vp,
        transcendentals=0,
        bytes_accessed=(ids.size * 4 + emb.size * 4
                        + w.size * jnp.dtype(w.dtype).itemsize
                        + b.size * 4 + N * Vp * 4),
    )

    out = pl.pallas_call(
        _toy_lm_kernel,
        out_shape=jax.ShapeDtypeStruct((N, Vp), jnp.float32),
        grid_spec=pltpu.PrefetchScalarGridSpec(
            num_scalar_prefetch=1,            # ids -> SMEM
            grid=(1,),
            in_specs=[
                pl.BlockSpec((V, D), lambda i, ids: (0, 0)),
                pl.BlockSpec((D, Vp), lambda i, ids: (0, 0)),
                pl.BlockSpec((1, Vp), lambda i, ids: (0, 0)),
            ],
            out_specs=pl.BlockSpec((N, Vp), lambda i, ids: (0, 0)),
        ),
        compiler_params=pltpu.CompilerParams(
            dimension_semantics=("arbitrary",)),
        cost_estimate=cost,
    )(ids, emb, w, b)

    if return_padded:
        return out.reshape(B, S, Vp)
    return out[:, :V].reshape(B, S, V)


def init_params(key, vocab_size=VOCAB_SIZE, embedding_dim=EMBED_DIM):
    """Raw torch-layout parameters (matching nn.Embedding / nn.Linear init)."""
    k_emb, k_w, k_b = jax.random.split(key, 3)
    emb_table = jax.random.normal(k_emb, (vocab_size, embedding_dim),
                                  jnp.float32)                     # N(0, 1)
    bound = 1.0 / (embedding_dim ** 0.5)
    fc_weight = jax.random.uniform(
        k_w, (vocab_size, embedding_dim), jnp.float32, -bound, bound)
    fc_bias = jax.random.uniform(
        k_b, (vocab_size,), jnp.float32, -bound, bound)
    return emb_table, fc_weight, fc_bias


if __name__ == "__main__":
    key = jax.random.PRNGKey(0)
    k_params, k_ids = jax.random.split(key)

    emb_table, fc_weight, fc_bias = init_params(k_params)

    B, S = 2, 8
    x = jax.random.randint(k_ids, (B, S), 0, VOCAB_SIZE, dtype=jnp.int32)

    fwd = jax.jit(toy_language_model)
    fwd_padded = jax.jit(toy_language_model, static_argnames=("return_padded",))

    # ---- exact (f32-weight) path -------------------------------------------
    params_f32 = prepare_params(emb_table, fc_weight, fc_bias,
                                param_dtype=jnp.float32)
    logits_f32 = jax.block_until_ready(fwd(x, params_f32))

    ref_f32 = jnp.take(emb_table, x, axis=0) @ fc_weight.T + fc_bias
    assert logits_f32.shape == (B, S, VOCAB_SIZE)
    assert jnp.allclose(logits_f32, ref_f32, atol=1e-4, rtol=1e-4)

    # ---- bf16-weight path (MXU-native on all generations, f32 accumulate) ---
    params_bf16 = prepare_params(emb_table, fc_weight, fc_bias,
                                 param_dtype=jnp.bfloat16, mask_pad=True)
    logits_bf16 = jax.block_until_ready(fwd(x, params_bf16))

    ref_bf16 = (jnp.take(emb_table, x, axis=0).astype(jnp.bfloat16).astype(jnp.float32)
                @ fc_weight.T.astype(jnp.bfloat16).astype(jnp.float32)
                + fc_bias)
    assert logits_bf16.shape == (B, S, VOCAB_SIZE)
    assert jnp.allclose(logits_bf16, ref_bf16, atol=1e-3, rtol=1e-3)

    # ---- padded fast path (no un-pad slice; pad columns masked to -1e30) ----
    padded = jax.block_until_ready(
        fwd_padded(x, params_bf16, return_padded=True))
    assert padded.shape == (B, S, LANE)
    assert jnp.allclose(padded[..., :VOCAB_SIZE], logits_bf16, atol=1e-5)
    assert bool(jnp.all(padded[..., VOCAB_SIZE:] < -1e29))

    print("KERNEL_OK")
</pallas_src>

<mosaic_0001>
module attributes {stable_mosaic.version = 11 : i64} {
  func.func @_toy_lm_kernel(%arg0: i32, %arg1: memref<16xi32, #tpu.memory_space<smem>>, %arg2: memref<100x16xf32, #tpu.memory_space<vmem>>, %arg3: memref<16x128xf32, #tpu.memory_space<vmem>>, %arg4: memref<1x128xf32, #tpu.memory_space<vmem>>, %arg5: memref<16x128xf32, #tpu.memory_space<vmem>>) attributes {dimension_semantics = [#tpu.dimension_semantics<arbitrary>], iteration_bounds = array<i64: 1>, scalar_prefetch = 1 : i64, scratch_operands = 0 : i64, tpu.core_type = #tpu.core_type<tc>, window_params = [{pipeline_mode = #tpu.pipeline_mode<synchronous>, transform_indices = @transform_0, window_bounds = array<i64: 100, 16>}, {pipeline_mode = #tpu.pipeline_mode<synchronous>, transform_indices = @transform_1, window_bounds = array<i64: 16, 128>}, {pipeline_mode = #tpu.pipeline_mode<synchronous>, transform_indices = @transform_2, window_bounds = array<i64: 1, 128>}, {pipeline_mode = #tpu.pipeline_mode<synchronous>, transform_indices = @transform_3, window_bounds = array<i64: 16, 128>}]} {
    %c0 = arith.constant 0 : index
    %0 = memref.load %arg1[%c0] : memref<16xi32, #tpu.memory_space<smem>>
    %1 = arith.index_cast %0 : i32 to index
    %c0_0 = arith.constant 0 : index
    %2 = vector.load %arg2[%1, %c0_0] : memref<100x16xf32, #tpu.memory_space<vmem>>, vector<1x16xf32>
    %c1 = arith.constant 1 : index
    %3 = memref.load %arg1[%c1] : memref<16xi32, #tpu.memory_space<smem>>
    %4 = arith.index_cast %3 : i32 to index
    %c0_1 = arith.constant 0 : index
    %5 = vector.load %arg2[%4, %c0_1] : memref<100x16xf32, #tpu.memory_space<vmem>>, vector<1x16xf32>
    %c2 = arith.constant 2 : index
    %6 = memref.load %arg1[%c2] : memref<16xi32, #tpu.memory_space<smem>>
    %7 = arith.index_cast %6 : i32 to index
    %c0_2 = arith.constant 0 : index
    %8 = vector.load %arg2[%7, %c0_2] : memref<100x16xf32, #tpu.memory_space<vmem>>, vector<1x16xf32>
    %c3 = arith.constant 3 : index
    %9 = memref.load %arg1[%c3] : memref<16xi32, #tpu.memory_space<smem>>
    %10 = arith.index_cast %9 : i32 to index
    %c0_3 = arith.constant 0 : index
    %11 = vector.load %arg2[%10, %c0_3] : memref<100x16xf32, #tpu.memory_space<vmem>>, vector<1x16xf32>
    %c4 = arith.constant 4 : index
    %12 = memref.load %arg1[%c4] : memref<16xi32, #tpu.memory_space<smem>>
    %13 = arith.index_cast %12 : i32 to index
    %c0_4 = arith.constant 0 : index
    %14 = vector.load %arg2[%13, %c0_4] : memref<100x16xf32, #tpu.memory_space<vmem>>, vector<1x16xf32>
    %c5 = arith.constant 5 : index
    %15 = memref.load %arg1[%c5] : memref<16xi32, #tpu.memory_space<smem>>
    %16 = arith.index_cast %15 : i32 to index
    %c0_5 = arith.constant 0 : index
    %17 = vector.load %arg2[%16, %c0_5] : memref<100x16xf32, #tpu.memory_space<vmem>>, vector<1x16xf32>
    %c6 = arith.constant 6 : index
    %18 = memref.load %arg1[%c6] : memref<16xi32, #tpu.memory_space<smem>>
    %19 = arith.index_cast %18 : i32 to index
    %c0_6 = arith.constant 0 : index
    %20 = vector.load %arg2[%19, %c0_6] : memref<100x16xf32, #tpu.memory_space<vmem>>, vector<1x16xf32>
    %c7 = arith.constant 7 : index
    %21 = memref.load %arg1[%c7] : memref<16xi32, #tpu.memory_space<smem>>
    %22 = arith.index_cast %21 : i32 to index
    %c0_7 = arith.constant 0 : index
    %23 = vector.load %arg2[%22, %c0_7] : memref<100x16xf32, #tpu.memory_space<vmem>>, vector<1x16xf32>
    %c8 = arith.constant 8 : index
    %24 = memref.load %arg1[%c8] : memref<16xi32, #tpu.memory_space<smem>>
    %25 = arith.index_cast %24 : i32 to index
    %c0_8 = arith.constant 0 : index
    %26 = vector.load %arg2[%25, %c0_8] : memref<100x16xf32, #tpu.memory_space<vmem>>, vector<1x16xf32>
    %c9 = arith.constant 9 : index
    %27 = memref.load %arg1[%c9] : memref<16xi32, #tpu.memory_space<smem>>
    %28 = arith.index_cast %27 : i32 to index
    %c0_9 = arith.constant 0 : index
    %29 = vector.load %arg2[%28, %c0_9] : memref<100x16xf32, #tpu.memory_space<vmem>>, vector<1x16xf32>
    %c10 = arith.constant 10 : index
    %30 = memref.load %arg1[%c10] : memref<16xi32, #tpu.memory_space<smem>>
    %31 = arith.index_cast %30 : i32 to index
    %c0_10 = arith.constant 0 : index
    %32 = vector.load %arg2[%31, %c0_10] : memref<100x16xf32, #tpu.memory_space<vmem>>, vector<1x16xf32>
    %c11 = arith.constant 11 : index
    %33 = memref.load %arg1[%c11] : memref<16xi32, #tpu.memory_space<smem>>
    %34 = arith.index_cast %33 : i32 to index
    %c0_11 = arith.constant 0 : index
    %35 = vector.load %arg2[%34, %c0_11] : memref<100x16xf32, #tpu.memory_space<vmem>>, vector<1x16xf32>
    %c12 = arith.constant 12 : index
    %36 = memref.load %arg1[%c12] : memref<16xi32, #tpu.memory_space<smem>>
    %37 = arith.index_cast %36 : i32 to index
    %c0_12 = arith.constant 0 : index
    %38 = vector.load %arg2[%37, %c0_12] : memref<100x16xf32, #tpu.memory_space<vmem>>, vector<1x16xf32>
    %c13 = arith.constant 13 : index
    %39 = memref.load %arg1[%c13] : memref<16xi32, #tpu.memory_space<smem>>
    %40 = arith.index_cast %39 : i32 to index
    %c0_13 = arith.constant 0 : index
    %41 = vector.load %arg2[%40, %c0_13] : memref<100x16xf32, #tpu.memory_space<vmem>>, vector<1x16xf32>
    %c14 = arith.constant 14 : index
    %42 = memref.load %arg1[%c14] : memref<16xi32, #tpu.memory_space<smem>>
    %43 = arith.index_cast %42 : i32 to index
    %c0_14 = arith.constant 0 : index
    %44 = vector.load %arg2[%43, %c0_14] : memref<100x16xf32, #tpu.memory_space<vmem>>, vector<1x16xf32>
    %c15 = arith.constant 15 : index
    %45 = memref.load %arg1[%c15] : memref<16xi32, #tpu.memory_space<smem>>
    %46 = arith.index_cast %45 : i32 to index
    %c0_15 = arith.constant 0 : index
    %47 = vector.load %arg2[%46, %c0_15] : memref<100x16xf32, #tpu.memory_space<vmem>>, vector<1x16xf32>
    %48 = tpu.concatenate %2, %5, %8, %11, %14, %17, %20, %23, %26, %29, %32, %35, %38, %41, %44, %47 in 0 : vector<1x16xf32>, vector<1x16xf32>, vector<1x16xf32>, vector<1x16xf32>, vector<1x16xf32>, vector<1x16xf32>, vector<1x16xf32>, vector<1x16xf32>, vector<1x16xf32>, vector<1x16xf32>, vector<1x16xf32>, vector<1x16xf32>, vector<1x16xf32>, vector<1x16xf32>, vector<1x16xf32>, vector<1x16xf32> -> vector<16x16xf32>
    %c0_16 = arith.constant 0 : index
    %c0_17 = arith.constant 0 : index
    %49 = vector.load %arg3[%c0_16, %c0_17] : memref<16x128xf32, #tpu.memory_space<vmem>>, vector<16x128xf32>
    %cst = arith.constant dense<0.000000e+00> : vector<16x128xf32>
    %50 = tpu.matmul %48, %49, %cst {dimension_numbers = #tpu.dot_dimension_numbers<[1], [0], [0], [1], [0, 0, 1, 1], [], []>} : vector<16x16xf32>, vector<16x128xf32>, vector<16x128xf32> -> vector<16x128xf32>
    %c0_18 = arith.constant 0 : index
    %c0_19 = arith.constant 0 : index
    %51 = vector.load %arg4[%c0_18, %c0_19] : memref<1x128xf32, #tpu.memory_space<vmem>>, vector<1x128xf32>
    %52 = vector.broadcast %51 : vector<1x128xf32> to vector<16x128xf32>
    %53 = arith.addf %50, %52 : vector<16x128xf32>
    %c0_20 = arith.constant 0 : index
    %c0_21 = arith.constant 0 : index
    %54 = vector.load %arg5[%c0_20, %c0_21] : memref<16x128xf32, #tpu.memory_space<vmem>>, vector<16x128xf32>
    tpu.vector_store %arg5[%c0_20, %c0_21], %53 {strides = array<i32>} : memref<16x128xf32, #tpu.memory_space<vmem>>, vector<16x128xf32>,
    return
  }
  func.func @transform_0(%arg0: i32, %arg1: memref<16xi32, #tpu.memory_space<smem>>) -> (i32, i32) {
    %c0_i32 = arith.constant 0 : i32
    %c0_i32_0 = arith.constant 0 : i32
    %c0_i32_1 = arith.constant 0 : i32
    return %c0_i32, %c0_i32_0 : i32, i32
  }
  func.func @transform_1(%arg0: i32, %arg1: memref<16xi32, #tpu.memory_space<smem>>) -> (i32, i32) {
    %c0_i32 = arith.constant 0 : i32
    %c0_i32_0 = arith.constant 0 : i32
    %c0_i32_1 = arith.constant 0 : i32
    return %c0_i32, %c0_i32_0 : i32, i32
  }
  func.func @transform_2(%arg0: i32, %arg1: memref<16xi32, #tpu.memory_space<smem>>) -> (i32, i32) {
    %c0_i32 = arith.constant 0 : i32
    %c0_i32_0 = arith.constant 0 : i32
    %c0_i32_1 = arith.constant 0 : i32
    return %c0_i32, %c0_i32_0 : i32, i32
  }
  func.func @transform_3(%arg0: i32, %arg1: memref<16xi32, #tpu.memory_space<smem>>) -> (i32, i32) {
    %c0_i32 = arith.constant 0 : i32
    %c0_i32_0 = arith.constant 0 : i32
    %c0_i32_1 = arith.constant 0 : i32
    return %c0_i32, %c0_i32_0 : i32, i32
  }
}

</mosaic_0001>

<llo_original>
// kernel: toy_language_model.1
$region0: #{toy_language_model.1}
  #allocation0 [shape = 'u32[]', space=smem, size = 0x4, offset = 0x4, fixed_abs, tag = 'smem constant byte address 0x4 - core index']
  #allocation1 [shape = 'u32[144,128]{1,0:T(1,128)}', space=vmem, size = 0x12000, scoped, tag = 'internal scratch']
  #allocation2 [shape = 's32[1]{0}', space=sflag, size = 0x4, scoped, tag = 'scoped memory for toy_language_model.1']
  #allocation3 [shape = 'u8[512]{0}', space=smem, size = 0x200, scoped, tag = 'prefetched SMEM operand 0']
  %s0 = inlined_call_operand.vmem [shape: s32[16], index: 0, kind: input, shape index: {}]
  %s1 = inlined_call_operand.vmem [shape: f32[100,16], index: 1, kind: input, shape index: {}]
  %s2 = inlined_call_operand.vmem [shape: f32[16,128], index: 2, kind: input, shape index: {}]
  %s3 = inlined_call_operand.vmem [shape: f32[1,128], index: 3, kind: input, shape index: {}]
  %s4 = inlined_call_operand.vmem [shape: f32[16,128], index: 4, kind: output, shape index: {}]
  %s5 = sld [smem:[#allocation0]]
  $region22: #{toy_language_model.1} parent=0
    _
  %s7 = ssub.s32 1, %s5
  %s8 = scalar_select 0, %s7, %s5
  %s9 = sshll.u32 %s0, 4
  %s10 = int_to_ptr.vmem [resolvable:$true] %s9
  %12 = dma.vmem_to_smem %s10, 16, [#allocation3], [#allocation2]
  %13 = dma.done [#allocation2], 16
  %14 = sfence
  // Predicated region
  $region2: #{toy_language_model.1} parent=0 // pred_check
    _
  $region3: #{toy_language_model.1} parent=0 // pred_check_branch
    %16 = sbr.rel (0) target = $region5
  $region4: #{toy_language_model.1} parent=0 // pred_region
    _
  $region5: #{toy_language_model.1} parent=0 // pred_fallthru
    _
  // Predicated region
  $region6: #{toy_language_model.1} parent=0 // pred_check
    _
  $region7: #{toy_language_model.1} parent=0 // pred_check_branch
    %18 = sbr.rel (0) target = $region9
  $region8: #{toy_language_model.1} parent=0 // pred_region
    _
  $region9: #{toy_language_model.1} parent=0 // pred_fallthru
    _
  // Predicated region
  $region10: #{toy_language_model.1} parent=0 // pred_check
    _
  $region11: #{toy_language_model.1} parent=0 // pred_check_branch
    %20 = sbr.rel (0) target = $region13
  $region12: #{toy_language_model.1} parent=0 // pred_region
    _
  $region13: #{toy_language_model.1} parent=0 // pred_fallthru
    _
  %s21 = sld [smem:[#allocation3]]
  %s22 = scalar_lea.vmem %s1, %s21
  %v23 = vld [vmem:[%s22] sm:$0x1]
  %s24 = sld [smem:[#allocation3 + $0x1]]
  %s25 = scalar_lea.vmem %s1, %s24
  %v26 = vld [vmem:[%s25] sm:$0x1]
  %s27 = sld [smem:[#allocation3 + $0x2]]
  %s28 = scalar_lea.vmem %s1, %s27
  %v29 = vld [vmem:[%s28] sm:$0x1]
  %s30 = sld [smem:[#allocation3 + $0x3]]
  %s31 = scalar_lea.vmem %s1, %s30
  %v32 = vld [vmem:[%s31] sm:$0x1]
  %s33 = sld [smem:[#allocation3 + $0x4]]
  %s34 = scalar_lea.vmem %s1, %s33
  %v35 = vld [vmem:[%s34] sm:$0x1]
  %s36 = sld [smem:[#allocation3 + $0x5]]
  %s37 = scalar_lea.vmem %s1, %s36
  %v38 = vld [vmem:[%s37] sm:$0x1]
  %s39 = sld [smem:[#allocation3 + $0x6]]
  %s40 = scalar_lea.vmem %s1, %s39
  %v41 = vld [vmem:[%s40] sm:$0x1]
  %s42 = sld [smem:[#allocation3 + $0x7]]
  %s43 = scalar_lea.vmem %s1, %s42
  %v44 = vld [vmem:[%s43] sm:$0x1]
  %s45 = sld [smem:[#allocation3 + $0x8]]
  %s46 = scalar_lea.vmem %s1, %s45
  %v47 = vld [vmem:[%s46] sm:$0x1]
  %s48 = sld [smem:[#allocation3 + $0x9]]
  %s49 = scalar_lea.vmem %s1, %s48
  %v50 = vld [vmem:[%s49] sm:$0x1]
  %s51 = sld [smem:[#allocation3 + $0xa]]
  %s52 = scalar_lea.vmem %s1, %s51
  %v53 = vld [vmem:[%s52] sm:$0x1]
  %s54 = sld [smem:[#allocation3 + $0xb]]
  %s55 = scalar_lea.vmem %s1, %s54
  %v56 = vld [vmem:[%s55] sm:$0x1]
  %s57 = sld [smem:[#allocation3 + $0xc]]
  %s58 = scalar_lea.vmem %s1, %s57
  %v59 = vld [vmem:[%s58] sm:$0x1]
  %s60 = sld [smem:[#allocation3 + $0xd]]
  %s61 = scalar_lea.vmem %s1, %s60
  %v62 = vld [vmem:[%s61] sm:$0x1]
  %s63 = sld [smem:[#allocation3 + $0xe]]
  %s64 = scalar_lea.vmem %s1, %s63
  %v65 = vld [vmem:[%s64] sm:$0x1]
  %s66 = sld [smem:[#allocation3 + $0xf]]
  %s67 = scalar_lea.vmem %s1, %s66
  %v68 = vld [vmem:[%s67] sm:$0x1]
  %v70 = vrot.slane %v26, 7
  %v73 = vrot.slane %v29, 6
  %v76 = vrot.slane %v32, 5
  %v79 = vrot.slane %v35, 4
  %v82 = vrot.slane %v38, 3
  %v85 = vrot.slane %v41, 2
  %v88 = vrot.slane %v44, 1
  %v91 = vrot.slane %v50, 7
  %v94 = vrot.slane %v53, 6
  %v97 = vrot.slane %v56, 5
  %v100 = vrot.slane %v59, 4
  %v103 = vrot.slane %v62, 3
  %v106 = vrot.slane %v65, 2
  %v109 = vrot.slane %v68, 1
  %vm111 = vcmask 1040384
  %v112 = vsel %vm111, %v23, %v70
  %vm113 = vcmask 1041408
  %v114 = vsel %vm113, %v112, %v73
  %vm115 = vcmask 1042432
  %v116 = vsel %vm115, %v114, %v76
  %vm117 = vcmask 1043456
  %v118 = vsel %vm117, %v116, %v79
  %vm119 = vcmask 1044480
  %v120 = vsel %vm119, %v118, %v82
  %vm121 = vcmask 1045504
  %v122 = vsel %vm121, %v120, %v85
  %vm123 = vcmask 1046528
  %v124 = vsel %vm123, %v122, %v88
  %v125 = vsel %vm111, %v47, %v91
  %v126 = vsel %vm113, %v125, %v94
  %v127 = vsel %vm115, %v126, %v97
  %v128 = vsel %vm117, %v127, %v100
  %v129 = vsel %vm119, %v128, %v103
  %v130 = vsel %vm121, %v129, %v106
  %v131 = vsel %vm123, %v130, %v109
  %v132 = vld [vmem:[%s2] sm:$0xff]
  %v133 = vld [vmem:[%s2 + $0x8] sm:$0xff]
  %v134 = vld [vmem:[%s3] sm:$0x1]
  %v136 = vlaneseq
  %v137 = vshrl.u32 %v136, 7
  %v138 = vsub.s32 0, %v137
  %v139 = vrot.slane %v134, %v138
  %vm141 = vcmask 130048
  %v143 = vsel %vm141, %v124, 0
  %v146 = vsel %vm141, %v131, 0
  %148 = vmatprep.subr.mxu0 0.0
  %149 = vmatpush1.msra.mxu0 %v132
  %150 = vmatprep.subr.mxu0 0.0
  %151 = vmatpush1.msra.mxu0 %v133
  %152 = vmatprep.subr.mxu0 0.0
  %153 = vmatpush1.msra.mxu0 0.0
  %154 = vmatprep.subr.mxu0 0.0
  %155 = vmatpush1.msra.mxu0 0.0
  %156 = vmatprep.subr.mxu0 0.0
  %157 = vmatpush1.msra.mxu0 0.0
  %158 = vmatprep.subr.mxu0 0.0
  %159 = vmatpush1.msra.mxu0 0.0
  %160 = vmatprep.subr.mxu0 0.0
  %161 = vmatpush1.msra.mxu0 0.0
  %162 = vmatprep.subr.mxu0 0.0
  %163 = vmatpush1.msra.mxu0 0.0
  %164 = vmatprep.subr.mxu0 0.0
  %165 = vmatpush1.msra.mxu0 0.0
  %166 = vmatprep.subr.mxu0 0.0
  %167 = vmatpush1.msra.mxu0 0.0
  %168 = vmatprep.subr.mxu0 0.0
  %169 = vmatpush1.msra.mxu0 0.0
  %170 = vmatprep.subr.mxu0 0.0
  %171 = vmatpush1.msra.mxu0 0.0
  %172 = vmatprep.subr.mxu0 0.0
  %173 = vmatpush1.msra.mxu0 0.0
  %174 = vmatprep.subr.mxu0 0.0
  %175 = vmatpush1.msra.mxu0 0.0
  %176 = vmatprep.subr.mxu0 0.0
  %177 = vmatpush1.msra.mxu0 0.0
  %178 = vmatprep.subr.mxu0 0.0
  %179 = vmatpush1.msra.mxu0 0.0
  %180 = vmatprep.subr.mxu0 0.0
  %181 = vmatpush1.msra.mxu0 0.0
  %182 = vmatprep.subr.mxu0 0.0
  %183 = vmatpush1.msra.mxu0 0.0
  %184 = vmatprep.subr.mxu0 0.0
  %185 = vmatpush1.msra.mxu0 0.0
  %186 = vmatprep.subr.mxu0 0.0
  %187 = vmatpush1.msra.mxu0 0.0
  %188 = vmatprep.subr.mxu0 0.0
  %189 = vmatpush1.msra.mxu0 0.0
  %190 = vmatprep.subr.mxu0 0.0
  %191 = vmatpush1.msra.mxu0 0.0
  %192 = vmatprep.subr.mxu0 0.0
  %193 = vmatpush1.msra.mxu0 0.0
  %194 = vmatprep.subr.mxu0 0.0
  %195 = vmatpush1.msra.mxu0 0.0
  %196 = vmatprep.subr.mxu0 0.0
  %197 = vmatpush1.msra.mxu0 0.0
  %198 = vmatprep.subr.mxu0 0.0
  %199 = vmatpush1.msra.mxu0 0.0
  %200 = vmatprep.subr.mxu0 0.0
  %201 = vmatpush1.msra.mxu0 0.0
  %202 = vmatprep.subr.mxu0 0.0
  %203 = vmatpush1.msra.mxu0 0.0
  %204 = vmatprep.subr.mxu0 0.0
  %205 = vmatpush1.msra.mxu0 0.0
  %206 = vmatprep.subr.mxu0 0.0
  %207 = vmatpush1.msra.mxu0 0.0
  %208 = vmatprep.subr.mxu0 0.0
  %209 = vmatpush1.msra.mxu0 0.0
  %210 = vmatprep.subr.mxu0 0.0
  %211 = vmatpush1.msra.mxu0 0.0
  %212 = vmatprep.mubr.f32.mxu0 0.0
  %213 = vmatmul.mubr.f32.gmra.mrb[0].mxu0 %v143
  %v214 = vpop.f32.mrb[0].mxu0
  %v215 = vadd.f32 %v139, %v214
  %v216 = vpop.f32.mrb[0].mxu0
  %217 = vmatprep.mubr.f32.mxu0 0.0
  %218 = vmatmul.mubr.f32.gmra.mrb[0].mxu0 %v146
  %v219 = vpop.f32.mrb[0].mxu0
  %v220 = vadd.f32 %v139, %v219
  %v221 = vpop.f32.mrb[0].mxu0
  %222 = vdwg.mxu0
  %223 = vst [vmem:[%s4] sm:$0xff] %v215
  %224 = vst [vmem:[%s4 + $0x8] sm:$0xff] %v220
  // Predicated region
  $region14: #{toy_language_model.1} parent=0 // pred_check
    _
  $region15: #{toy_language_model.1} parent=0 // pred_check_branch
    %226 = sbr.rel (0) target = $region17
  $region16: #{toy_language_model.1} parent=0 // pred_region
    _
  $region17: #{toy_language_model.1} parent=0 // pred_fallthru
    _
  // Predicated region
  $region18: #{toy_language_model.1} parent=0 // pred_check
    _
  $region19: #{toy_language_model.1} parent=0 // pred_check_branch
    %228 = sbr.rel (0) target = $region21
  $region20: #{toy_language_model.1} parent=0 // pred_region
    _
  $region21: #{toy_language_model.1} parent=0 // pred_fallthru
    _

</llo_original>
